<compile_context>
chip_gen: v5e
topology: v5e:2x2
jax: 0.10.0
libtpu: 0.0.40
codegen_flags: <defaults>
</compile_context>

<pallas_src>
import jax
import jax.numpy as jnp
from jax.experimental import pallas as pl
from jax.experimental.pallas import tpu as pltpu

MID_CHANNEL = 12
STUDENT_LAYERS = 4
_TILE_CAP = 32768            # lane-axis tile cap (multiple of 128)


def _round_up(x, m):
    return ((x + m - 1) // m) * m


def _cdiv(a, b):
    return -(-a // b)


def _vmem_limit_bytes():
    """64 MB on v5e/v6e (128 MiB VMEM), 32 MB on v7x (64 MiB); safe fallback 32 MB."""
    try:
        cap = pltpu.get_tpu_info().vmem_capacity_bytes
    except Exception:
        cap = 64 * 1024 * 1024
    return int(min(64 * 1024 * 1024, cap // 2))


def _pick_tile_hw(hw, io_bytes, vmem_limit):
    """Largest lane tile that fits the VMEM budget (<= 32768), balanced over hw."""
    c_pad = 16  # mid_channel=12 pads to 16 sublanes for both f32 (8,128) and bf16 (16,128)
    # Per lane-column: feat + y0 + out blocks double-buffered in io dtype + f32 carry scratch.
    per_lane = c_pad * (3 * 2 * io_bytes + 4)
    budget = max(per_lane * 128, vmem_limit - (2 << 20))   # headroom: weights, compiler scratch
    cap = max(128, min(_TILE_CAP, (budget // per_lane) // 128 * 128))
    n_tiles = _cdiv(hw, cap)
    tile = _round_up(_cdiv(hw, n_tiles), 128)
    return tile, n_tiles, tile * n_tiles


# ------------------------------------------------------------------ kernel ---
def _reviewkd_kernel(feat_ref, y0_ref, wx_ref, wy_ref, b_ref, out_ref, carry_ref):
    """One (n, hw-tile, stage) grid step of the fused ReviewKD stack.

    feat_ref  : (1, 1, C, T) VMEM   feature x fed to this ABF stage (io dtype)
    y0_ref    : (1, C, T)    VMEM   deepest feature (seeds the carry at s == 0)
    wx_ref    : (S-1, 2, C)  VMEM   resident conv-weight halves applied to x
    wy_ref    : (S-1, 2, C)  VMEM   resident conv-weight halves applied to the carry
    b_ref     : (S-1, 2)     SMEM   conv bias table, indexed by stage id
    out_ref   : (1, 1, C, T) VMEM   this stage's output tile (io dtype)
    carry_ref : (C, T)       VMEM scratch: running `out` (f32), resident across stages
    """
    s = pl.program_id(2)

    # Seed the carried feature at the first stage of every (n, tile).  The carry
    # lives only in VMEM — it never touches HBM between stages.
    @pl.when(s == 0)
    def _():
        carry_ref[...] = y0_ref[0].astype(jnp.float32)

    x = feat_ref[0, 0].astype(jnp.float32)       # (C, T), f32 math in-register
    y = carry_ref[...]                           # (C, T)
    wx = wx_ref[s]                               # (2, C)
    wy = wy_ref[s]                               # (2, C)

    # 1x1 conv over cat([x, y], channel)  ==  wx @ x + wy @ y + b   (MXU; free filler)
    att = (jnp.dot(wx, x, preferred_element_type=jnp.float32)
           + jnp.dot(wy, y, preferred_element_type=jnp.float32))    # (2, T)
    z0 = jax.nn.sigmoid(att[0:1, :] + b_ref[s, 0])                  # bias: SMEM scalars
    z1 = jax.nn.sigmoid(att[1:2, :] + b_ref[s, 1])

    fused = x * z0 + y * z1
    out_ref[0, 0] = fused.astype(out_ref.dtype)
    carry_ref[...] = fused


def _reviewkd_pallas(feats, y0, wx, wy, bias, tile_hw, vmem_limit):
    """feats: (S-1, N, C, HWp); y0: (N, C, HWp); wx/wy: (S-1, 2, C); bias: (S-1, 2)."""
    s1, n, c, hwp = feats.shape
    grid = (n, hwp // tile_hw, s1)        # (batch, hw tiles) parallel, stages innermost
    return pl.pallas_call(
        _reviewkd_kernel,
        out_shape=jax.ShapeDtypeStruct((s1, n, c, hwp), feats.dtype),
        grid_spec=pltpu.PrefetchScalarGridSpec(
            num_scalar_prefetch=0,
            grid=grid,
            in_specs=[
                pl.BlockSpec((1, 1, c, tile_hw), lambda b, t, s: (s, b, 0, t)),  # stage feature
                pl.BlockSpec((1, c, tile_hw), lambda b, t, s: (b, 0, t)),        # deepest feature
                pl.BlockSpec((s1, 2, c), lambda b, t, s: (0, 0, 0)),             # wx (resident)
                pl.BlockSpec((s1, 2, c), lambda b, t, s: (0, 0, 0)),             # wy (resident)
                pl.BlockSpec(memory_space=pltpu.MemorySpace.SMEM),               # bias table
            ],
            out_specs=pl.BlockSpec((1, 1, c, tile_hw), lambda b, t, s: (s, b, 0, t)),
            scratch_shapes=[pltpu.VMEM((c, tile_hw), jnp.float32)],              # carried `out`
        ),
        compiler_params=pltpu.CompilerParams(
            dimension_semantics=("parallel", "parallel", "arbitrary"),
            vmem_limit_bytes=vmem_limit,
        ),
    )(feats, y0, wx, wy, bias)


# -------------------------------------------------------------------- glue ---
def init_params(key, mid_channel=MID_CHANNEL, student_layer_number=STUDENT_LAYERS):
    """Deterministic Conv2d(2*mid, 2, 1) params (PyTorch-style uniform bound)."""
    params = []
    fan_in = 2 * mid_channel
    bound = 1.0 / jnp.sqrt(float(fan_in))
    for i in range(student_layer_number - 1):
        kw, kb = jax.random.split(jax.random.fold_in(key, i))
        w = jax.random.uniform(kw, (2, 2 * mid_channel), jnp.float32, -bound, bound)
        b = jax.random.uniform(kb, (2,), jnp.float32, -bound, bound)
        params.append((w, b))
    # ReviewKD.__init__ reverses the ABF list
    return params[::-1]


def review_kd_forward(features, params, io_dtype=jnp.float32):
    """features: list of (N, C, H, W) arrays. Returns the list the torch module returns."""
    x_rev = features[::-1]
    s_total = len(features)
    if s_total < 2:
        return [x_rev[0]]

    n, c, h, w = x_rev[0].shape
    hw = h * w
    io_bytes = jnp.dtype(io_dtype).itemsize
    vmem_limit = _vmem_limit_bytes()
    tile_hw, _, hw_pad = _pick_tile_hw(hw, io_bytes, vmem_limit)

    def to_nc_hw(f):
        # Free reshape of NCHW (no transpose); pad lanes only when needed.
        g = f.reshape(n, c, hw)
        if hw_pad != hw:
            g = jnp.pad(g, ((0, 0), (0, 0), (0, hw_pad - hw)))
        return g.astype(io_dtype)

    y0 = to_nc_hw(x_rev[0])                                          # (N, C, HWp)
    feats = jnp.stack([to_nc_hw(f) for f in x_rev[1:]], axis=0)      # (S-1, N, C, HWp)

    wx = jnp.stack([wp[:, :c] for (wp, _) in params], axis=0)        # (S-1, 2, C)
    wy = jnp.stack([wp[:, c:] for (wp, _) in params], axis=0)        # (S-1, 2, C)
    bias = jnp.stack([bp.reshape(2) for (_, bp) in params], axis=0)  # (S-1, 2)

    outs = _reviewkd_pallas(feats, y0, wx, wy, bias, tile_hw, vmem_limit)
    outs = outs[:, :, :, :hw].astype(jnp.float32)                    # (S-1, N, C, HW)

    stage_results = [jnp.squeeze(outs[s].reshape(n, c, h, w))        # torch.squeeze
                     for s in range(s_total - 1)]
    return stage_results[::-1] + [x_rev[0]]


# ----------------------------------------------------------------- reference --
def abf_ref(x, y, w, b):
    z = jnp.concatenate([x, y], axis=1)                       # (N, 2C, H, W)
    att = jnp.einsum('nchw,oc->nohw', z, w) + b.reshape(1, 2, 1, 1)
    att = jax.nn.sigmoid(att)
    return x * att[:, 0:1] + y * att[:, 1:2]


def review_kd_ref(features, params):
    x = features[::-1]
    results = [x[0]]
    out = x[0]
    for feat, (w, b) in zip(x[1:], params):
        out = jnp.squeeze(abf_ref(feat, out, w, b))
        results.insert(0, out)
    return results


# -------------------------------------------------------------------- main ---
if __name__ == "__main__":
    key = jax.random.PRNGKey(0)
    N, C, H, W = 2, MID_CHANNEL, 8, 8     # HW = 64 lanes (pads to one 128-lane tile)

    fkeys = jax.random.split(key, STUDENT_LAYERS + 1)
    features = [jax.random.normal(fkeys[i], (N, C, H, W), jnp.float32)
                for i in range(STUDENT_LAYERS)]
    params = init_params(fkeys[-1])

    refs = review_kd_ref(features, params)

    # Exact-precision path (f32 streams): matches the reference to 1e-5.
    outs = review_kd_forward(features, params, io_dtype=jnp.float32)
    outs = [jax.block_until_ready(o) for o in outs]
    for o, r in zip(outs, refs):
        assert o.shape == r.shape, (o.shape, r.shape)
        assert jnp.allclose(o, r, atol=1e-5, rtol=1e-5)

    # Reduced-HBM-traffic path (bf16 streams, f32 math in-kernel) — looser tolerance.
    outs_bf = review_kd_forward(features, params, io_dtype=jnp.bfloat16)
    outs_bf = [jax.block_until_ready(o) for o in outs_bf]
    for o, r in zip(outs_bf, refs):
        assert o.shape == r.shape, (o.shape, r.shape)
        assert jnp.allclose(o, r, atol=5e-2, rtol=5e-2)

    print("KERNEL_OK")
</pallas_src>

<mosaic_0001>
module attributes {stable_mosaic.version = 11 : i64} {
  func.func @_reviewkd_kernel(%arg0: i32, %arg1: i32, %arg2: i32, %arg3: memref<1x1x12x128xf32, #tpu.memory_space<vmem>>, %arg4: memref<1x12x128xf32, #tpu.memory_space<vmem>>, %arg5: memref<3x2x12xf32, #tpu.memory_space<vmem>>, %arg6: memref<3x2x12xf32, #tpu.memory_space<vmem>>, %arg7: memref<3x2xf32, #tpu.memory_space<smem>>, %arg8: memref<1x1x12x128xf32, #tpu.memory_space<vmem>>, %arg9: memref<12x128xf32, #tpu.memory_space<vmem>>) attributes {dimension_semantics = [#tpu.dimension_semantics<parallel>, #tpu.dimension_semantics<parallel>, #tpu.dimension_semantics<arbitrary>], iteration_bounds = array<i64: 2, 1, 3>, scalar_prefetch = 0 : i64, scratch_operands = 1 : i64, tpu.core_type = #tpu.core_type<tc>, window_params = [{transform_indices = @transform_0, window_bounds = array<i64: 1, 1, 12, 128>}, {transform_indices = @transform_1, window_bounds = array<i64: 1, 12, 128>}, {pipeline_mode = #tpu.pipeline_mode<synchronous>, transform_indices = @transform_2, window_bounds = array<i64: 3, 2, 12>}, {pipeline_mode = #tpu.pipeline_mode<synchronous>, transform_indices = @transform_3, window_bounds = array<i64: 3, 2, 12>}, {transform_indices = @transform_4, window_bounds = array<i64: 3, 2>}, {transform_indices = @transform_5, window_bounds = array<i64: 1, 1, 12, 128>}]} {
    %c0_i32 = arith.constant 0 : i32
    %0 = arith.cmpi eq, %arg2, %c0_i32 : i32
    %1 = arith.extui %0 : i1 to i32
    %c0_i32_0 = arith.constant 0 : i32
    %2 = arith.cmpi ne, %1, %c0_i32_0 : i32
    scf.if %2 {
      %c0_20 = arith.constant 0 : index
      %c0_21 = arith.constant 0 : index
      %c0_22 = arith.constant 0 : index
      %44 = vector.load %arg4[%c0_20, %c0_21, %c0_22] : memref<1x12x128xf32, #tpu.memory_space<vmem>>, vector<1x12x128xf32>
      %45 = vector.shape_cast %44 : vector<1x12x128xf32> to vector<12x128xf32>
      %c0_23 = arith.constant 0 : index
      %c0_24 = arith.constant 0 : index
      %46 = vector.load %arg9[%c0_23, %c0_24] : memref<12x128xf32, #tpu.memory_space<vmem>>, vector<12x128xf32>
      tpu.vector_store %arg9[%c0_23, %c0_24], %45 {strides = array<i32>} : memref<12x128xf32, #tpu.memory_space<vmem>>, vector<12x128xf32>,
    } else {
    }
    %c0 = arith.constant 0 : index
    %c0_1 = arith.constant 0 : index
    %c0_2 = arith.constant 0 : index
    %c0_3 = arith.constant 0 : index
    %3 = vector.load %arg3[%c0, %c0_1, %c0_2, %c0_3] : memref<1x1x12x128xf32, #tpu.memory_space<vmem>>, vector<1x1x12x128xf32>
    %4 = vector.shape_cast %3 : vector<1x1x12x128xf32> to vector<12x128xf32>
    %c0_4 = arith.constant 0 : index
    %c0_5 = arith.constant 0 : index
    %5 = vector.load %arg9[%c0_4, %c0_5] : memref<12x128xf32, #tpu.memory_space<vmem>>, vector<12x128xf32>
    %6 = arith.index_cast %arg2 : i32 to index
    %c0_6 = arith.constant 0 : index
    %c0_7 = arith.constant 0 : index
    %7 = vector.load %arg5[%6, %c0_6, %c0_7] : memref<3x2x12xf32, #tpu.memory_space<vmem>>, vector<1x2x12xf32>
    %8 = vector.shape_cast %7 : vector<1x2x12xf32> to vector<2x12xf32>
    %9 = arith.index_cast %arg2 : i32 to index
    %c0_8 = arith.constant 0 : index
    %c0_9 = arith.constant 0 : index
    %10 = vector.load %arg6[%9, %c0_8, %c0_9] : memref<3x2x12xf32, #tpu.memory_space<vmem>>, vector<1x2x12xf32>
    %11 = vector.shape_cast %10 : vector<1x2x12xf32> to vector<2x12xf32>
    %cst = arith.constant dense<0.000000e+00> : vector<2x128xf32>
    %12 = tpu.matmul %8, %4, %cst {dimension_numbers = #tpu.dot_dimension_numbers<[1], [0], [0], [1], [0, 0, 1, 1], [], []>} : vector<2x12xf32>, vector<12x128xf32>, vector<2x128xf32> -> vector<2x128xf32>
    %cst_10 = arith.constant dense<0.000000e+00> : vector<2x128xf32>
    %13 = tpu.matmul %11, %5, %cst_10 {dimension_numbers = #tpu.dot_dimension_numbers<[1], [0], [0], [1], [0, 0, 1, 1], [], []>} : vector<2x12xf32>, vector<12x128xf32>, vector<2x128xf32> -> vector<2x128xf32>
    %14 = arith.addf %12, %13 : vector<2x128xf32>
    %15 = vector.extract_strided_slice %14 {offsets = [0, 0], sizes = [1, 128], strides = [1, 1]} : vector<2x128xf32> to vector<1x128xf32>
    %16 = arith.index_cast %arg2 : i32 to index
    %c0_11 = arith.constant 0 : index
    %17 = memref.load %arg7[%16, %c0_11] : memref<3x2xf32, #tpu.memory_space<smem>>
    %18 = vector.broadcast %17 : f32 to vector<1x128xf32>
    %19 = arith.addf %15, %18 : vector<1x128xf32>
    %20 = arith.negf %19 : vector<1x128xf32>
    %21 = math.exp %20 : vector<1x128xf32>
    %cst_12 = arith.constant 1.000000e+00 : f32
    %22 = vector.broadcast %cst_12 : f32 to vector<1x128xf32>
    %23 = arith.addf %22, %21 : vector<1x128xf32>
    %24 = arith.divf %22, %23 : vector<1x128xf32>
    %25 = vector.extract_strided_slice %14 {offsets = [1, 0], sizes = [1, 128], strides = [1, 1]} : vector<2x128xf32> to vector<1x128xf32>
    %26 = arith.index_cast %arg2 : i32 to index
    %c1 = arith.constant 1 : index
    %27 = memref.load %arg7[%26, %c1] : memref<3x2xf32, #tpu.memory_space<smem>>
    %28 = vector.broadcast %27 : f32 to vector<1x128xf32>
    %29 = arith.addf %25, %28 : vector<1x128xf32>
    %30 = arith.negf %29 : vector<1x128xf32>
    %31 = math.exp %30 : vector<1x128xf32>
    %cst_13 = arith.constant 1.000000e+00 : f32
    %32 = vector.broadcast %cst_13 : f32 to vector<1x128xf32>
    %33 = arith.addf %32, %31 : vector<1x128xf32>
    %34 = arith.divf %32, %33 : vector<1x128xf32>
    %35 = vector.broadcast %24 : vector<1x128xf32> to vector<12x128xf32>
    %36 = arith.mulf %4, %35 : vector<12x128xf32>
    %37 = vector.broadcast %34 : vector<1x128xf32> to vector<12x128xf32>
    %38 = arith.mulf %5, %37 : vector<12x128xf32>
    %39 = arith.addf %36, %38 : vector<12x128xf32>
    %c0_14 = arith.constant 0 : index
    %c0_15 = arith.constant 0 : index
    %c0_16 = arith.constant 0 : index
    %c0_17 = arith.constant 0 : index
    %40 = vector.load %arg8[%c0_14, %c0_15, %c0_16, %c0_17] : memref<1x1x12x128xf32, #tpu.memory_space<vmem>>, vector<1x1x12x128xf32>
    %41 = vector.shape_cast %40 : vector<1x1x12x128xf32> to vector<12x128xf32>
    %42 = vector.shape_cast %39 : vector<12x128xf32> to vector<1x1x12x128xf32>
    tpu.vector_store %arg8[%c0_14, %c0_15, %c0_16, %c0_17], %42 {strides = array<i32>} : memref<1x1x12x128xf32, #tpu.memory_space<vmem>>, vector<1x1x12x128xf32>,
    %c0_18 = arith.constant 0 : index
    %c0_19 = arith.constant 0 : index
    %43 = vector.load %arg9[%c0_18, %c0_19] : memref<12x128xf32, #tpu.memory_space<vmem>>, vector<12x128xf32>
    tpu.vector_store %arg9[%c0_18, %c0_19], %39 {strides = array<i32>} : memref<12x128xf32, #tpu.memory_space<vmem>>, vector<12x128xf32>,
    return
  }
  func.func @transform_0(%arg0: i32, %arg1: i32, %arg2: i32) -> (i32, i32, i32, i32) {
    %c0_i32 = arith.constant 0 : i32
    %c0_i32_0 = arith.constant 0 : i32
    return %arg2, %arg0, %c0_i32, %arg1 : i32, i32, i32, i32
  }
  func.func @transform_1(%arg0: i32, %arg1: i32, %arg2: i32) -> (i32, i32, i32) {
    %c0_i32 = arith.constant 0 : i32
    %c0_i32_0 = arith.constant 0 : i32
    return %arg0, %c0_i32, %arg1 : i32, i32, i32
  }
  func.func @transform_2(%arg0: i32, %arg1: i32, %arg2: i32) -> (i32, i32, i32) {
    %c0_i32 = arith.constant 0 : i32
    %c0_i32_0 = arith.constant 0 : i32
    %c0_i32_1 = arith.constant 0 : i32
    %c0_i32_2 = arith.constant 0 : i32
    return %c0_i32, %c0_i32_0, %c0_i32_1 : i32, i32, i32
  }
  func.func @transform_3(%arg0: i32, %arg1: i32, %arg2: i32) -> (i32, i32, i32) {
    %c0_i32 = arith.constant 0 : i32
    %c0_i32_0 = arith.constant 0 : i32
    %c0_i32_1 = arith.constant 0 : i32
    %c0_i32_2 = arith.constant 0 : i32
    return %c0_i32, %c0_i32_0, %c0_i32_1 : i32, i32, i32
  }
  func.func @transform_4(%arg0: i32, %arg1: i32, %arg2: i32) -> (i32, i32) {
    %c0_i32 = arith.constant 0 : i32
    %c0_i32_0 = arith.constant 0 : i32
    %c0_i32_1 = arith.constant 0 : i32
    return %c0_i32, %c0_i32_0 : i32, i32
  }
  func.func @transform_5(%arg0: i32, %arg1: i32, %arg2: i32) -> (i32, i32, i32, i32) {
    %c0_i32 = arith.constant 0 : i32
    %c0_i32_0 = arith.constant 0 : i32
    return %arg2, %arg0, %c0_i32, %arg1 : i32, i32, i32, i32
  }
}

</mosaic_0001>

<llo_original>
// kernel: tpu_custom_call.1
$region0: #{tpu_custom_call.1}
  #allocation0 [shape = 'u32[]', space=smem, size = 0x4, offset = 0x4, fixed_abs, tag = 'smem constant byte address 0x4 - core index']
  #allocation1 [shape = 'u32[72,128]{1,0:T(1,128)}', space=vmem, size = 0x9000, scoped, tag = 'internal scratch']
  #allocation2 [shape = 'f32[12,128]{1,0:T(8,128)}', space=vmem, size = 0x2000, scoped, tag = 'scratch operand']
  %s0 = inlined_call_operand.vmem [shape: f32[3,2,12,128], index: 0, kind: input, shape index: {}]
  %s1 = inlined_call_operand.vmem [shape: f32[2,12,128], index: 1, kind: input, shape index: {}]
  %s2 = inlined_call_operand.vmem [shape: f32[3,2,12], index: 2, kind: input, shape index: {}]
  %s3 = inlined_call_operand.vmem [shape: f32[3,2,12], index: 3, kind: input, shape index: {}]
  %s4 = inlined_call_operand.vmem [shape: f32[3,2], index: 4, kind: input, shape index: {}]
  %s5 = inlined_call_operand.vmem [shape: f32[3,2,12,128], index: 5, kind: output, shape index: {}]
  %s6 = sld [smem:[#allocation0]]
  $region61: #{tpu_custom_call.1} parent=0
    _
  %s8 = ssub.s32 1, %s6
  %s9 = scalar_select 0, %s8, %s6
  $region1: #{tpu_custom_call.1} parent=0
    #allocation3 [shape = 'u8[2048]{0}', space=smem, size = 0x800, scoped, tag = 'input window, operand 4, single buffered']
    #allocation4 [shape = 's32[2]{0}', space=sflag, size = 0x8, scoped, tag = 'scoped memory for tpu_custom_call.1']
    %10 = vsyncpa [#allocation4], 0
    loop: start=0, step=1, limit=8
    $region2: #{tpu_custom_call.1} parent=1 // loop_pre_header
      _
    $region3: #{tpu_custom_call.1} parent=1 // loop_header
      %s12 = sphi 0, %s16
      %p13 = scmp.ge.s32.totalorder %s12, 8
      %s19 = sphi 0, %s38
      %s20 = sphi 0, %s34
      %s21 = sphi 0, %s30
      %s22 = sphi 0, %s19
      %s23 = sphi 0, %s20
      %s24 = sphi 0, %s21
      %s25 = sphi 0, %s22
      %s26 = sphi 0, %s23
      %s27 = sphi 0, %s24
      %s45 = sphi 0, %s47
      %s48 = sphi 0, %s45
      %s49 = sphi 0, %s48
      %s65 = sphi 0, %s49
      %s73 = sphi 0, %s75
      %s76 = sphi 0, %s73
      %s77 = sphi 0, %s76
      %s93 = sphi 0, %s77
      %s97 = sphi 0, %s97
      %s99 = sphi 0, %s97
      %s100 = sphi 0, %s99
      %s114 = sphi 0, %s100
      %s118 = sphi 0, %s118
      %s120 = sphi 0, %s118
      %s121 = sphi 0, %s120
      %s135 = sphi 0, %s121
      %s139 = sphi 0, %s139
      %s141 = sphi 0, %s139
      %s142 = sphi 0, %s141
      %s156 = sphi 0, %s142
      %s166 = sphi 0, %s168
      %s169 = sphi 0, %s166
      %s170 = sphi 0, %s169
      %s186 = sphi 0, %s170
    $region4: #{tpu_custom_call.1} parent=1 // loop_header_branch
      %15 = sbr.rel (%p13) target = $region8
    $region5: #{tpu_custom_call.1} parent=1 // loop_body
      %s17 = ssub.s32 %s12, 1
      %s18 = ssub.s32 %s12, 2
      %s28 = sadd.s32 1, %s21
      %p29 = scmp.ge.s32.totalorder %s28, 3
      %s30 = scalar_select %p29, 0, %s28
      %s31 = sadd.s32 1, %s20
      %s32 = scalar_select %p29, %s31, %s20
      %p33 = scmp.ge.s32.totalorder %s32, 1
      %s34 = scalar_select %p33, 0, %s32
      %s35 = sadd.s32 1, %s19
      %s36 = scalar_select %p33, %s35, %s19
      %p37 = scmp.ge.s32.totalorder %s36, 2
      %s38 = scalar_select %p37, 0, %s36
      %s39 = ssub.s32 %s21, %s30
      %s40 = ssub.s32 %s19, %s38
      %s41 = sor.u32 %s39, %s40
      %s42 = ssub.s32 %s20, %s34
      %s43 = sor.u32 %s41, %s42
      %p44 = scmp.eq.s32.totalorder %s43, 0
      %s46 = sadd.s32 %s45, 1
      %s47 = scalar_select %p44, %s45, %s46
      %p50 = pneg %p44
      %p51 = scmp.eq.s32.totalorder %s12, 5
      %p52 = por %p50, %p51
      %p53 = scmp.ne.s32.totalorder %s45, %s48
      %p54 = scmp.eq.s32.totalorder %s12, 0
      %p55 = por %p53, %p54
      %p56 = scmp.ne.s32.totalorder %s45, %s48
      %p57 = scmp.eq.s32.totalorder %s17, 5
      %p58 = por %p56, %p57
      %p59 = scmp.ne.s32.totalorder %s48, %s49
      %p60 = scmp.eq.s32.totalorder %s17, 0
      %p61 = por %p59, %p60
      %p62 = scmp.ne.s32.totalorder %s48, %s49
      %p63 = scmp.eq.s32.totalorder %s18, 5
      %p64 = por %p62, %p63
      %p66 = scmp.ne.s32.totalorder %s49, %s65
      %p67 = scmp.eq.s32.totalorder %s18, 0
      %p68 = por %p66, %p67
      %s69 = ssub.s32 %s19, %s38
      %s70 = ssub.s32 %s20, %s34
      %s71 = sor.u32 %s69, %s70
      %p72 = scmp.eq.s32.totalorder %s71, 0
      %s74 = sadd.s32 %s73, 1
      %s75 = scalar_select %p72, %s73, %s74
      %p78 = pneg %p72
      %p79 = scmp.eq.s32.totalorder %s12, 5
      %p80 = por %p78, %p79
      %p81 = scmp.ne.s32.totalorder %s73, %s76
      %p82 = scmp.eq.s32.totalorder %s12, 0
      %p83 = por %p81, %p82
      %p84 = scmp.ne.s32.totalorder %s73, %s76
      %p85 = scmp.eq.s32.totalorder %s17, 5
      %p86 = por %p84, %p85
      %p87 = scmp.ne.s32.totalorder %s76, %s77
      %p88 = scmp.eq.s32.totalorder %s17, 0
      %p89 = por %p87, %p88
      %p90 = scmp.ne.s32.totalorder %s76, %s77
      %p91 = scmp.eq.s32.totalorder %s18, 5
      %p92 = por %p90, %p91
      %p94 = scmp.ne.s32.totalorder %s77, %s93
      %p95 = scmp.eq.s32.totalorder %s18, 0
      %p96 = por %p94, %p95
      %s98 = sadd.s32 %s97, 1
      %p101 = scmp.eq.s32.totalorder %s12, 5
      %p102 = scmp.ne.s32.totalorder %s97, %s99
      %p103 = scmp.eq.s32.totalorder %s12, 0
      %p104 = por %p102, %p103
      %p105 = scmp.ne.s32.totalorder %s97, %s99
      %p106 = scmp.eq.s32.totalorder %s17, 5
      %p107 = por %p105, %p106
      %p108 = scmp.ne.s32.totalorder %s99, %s100
      %p109 = scmp.eq.s32.totalorder %s17, 0
      %p110 = por %p108, %p109
      %p111 = scmp.ne.s32.totalorder %s99, %s100
      %p112 = scmp.eq.s32.totalorder %s18, 5
      %p113 = por %p111, %p112
      %p115 = scmp.ne.s32.totalorder %s100, %s114
      %p116 = scmp.eq.s32.totalorder %s18, 0
      %p117 = por %p115, %p116
      %s119 = sadd.s32 %s118, 1
      %p122 = scmp.eq.s32.totalorder %s12, 5
      %p123 = scmp.ne.s32.totalorder %s118, %s120
      %p124 = scmp.eq.s32.totalorder %s12, 0
      %p125 = por %p123, %p124
      %p126 = scmp.ne.s32.totalorder %s118, %s120
      %p127 = scmp.eq.s32.totalorder %s17, 5
      %p128 = por %p126, %p127
      %p129 = scmp.ne.s32.totalorder %s120, %s121
      %p130 = scmp.eq.s32.totalorder %s17, 0
      %p131 = por %p129, %p130
      %p132 = scmp.ne.s32.totalorder %s120, %s121
      %p133 = scmp.eq.s32.totalorder %s18, 5
      %p134 = por %p132, %p133
      %p136 = scmp.ne.s32.totalorder %s121, %s135
      %p137 = scmp.eq.s32.totalorder %s18, 0
      %p138 = por %p136, %p137
      %s140 = sadd.s32 %s139, 1
      %p143 = scmp.eq.s32.totalorder %s12, 5
      %p144 = scmp.ne.s32.totalorder %s139, %s141
      %p145 = scmp.eq.s32.totalorder %s12, 0
      %p146 = por %p144, %p145
      %p147 = scmp.ne.s32.totalorder %s139, %s141
      %p148 = scmp.eq.s32.totalorder %s17, 5
      %p149 = por %p147, %p148
      %p150 = scmp.ne.s32.totalorder %s141, %s142
      %p151 = scmp.eq.s32.totalorder %s17, 0
      %p152 = por %p150, %p151
      %p153 = scmp.ne.s32.totalorder %s141, %s142
      %p154 = scmp.eq.s32.totalorder %s18, 5
      %p155 = por %p153, %p154
      %p157 = scmp.ne.s32.totalorder %s142, %s156
      %p158 = scmp.eq.s32.totalorder %s18, 0
      %p159 = por %p157, %p158
      %s160 = ssub.s32 %s21, %s30
      %s161 = ssub.s32 %s19, %s38
      %s162 = sor.u32 %s160, %s161
      %s163 = ssub.s32 %s20, %s34
      %s164 = sor.u32 %s162, %s163
      %p165 = scmp.eq.s32.totalorder %s164, 0
      %s167 = sadd.s32 %s166, 1
      %s168 = scalar_select %p165, %s166, %s167
      %p171 = pneg %p165
      %p172 = scmp.eq.s32.totalorder %s12, 5
      %p173 = por %p171, %p172
      %p174 = scmp.ne.s32.totalorder %s166, %s169
      %p175 = scmp.eq.s32.totalorder %s12, 0
      %p176 = por %p174, %p175
      %p177 = scmp.ne.s32.totalorder %s166, %s169
      %p178 = scmp.eq.s32.totalorder %s17, 5
      %p179 = por %p177, %p178
      %p180 = scmp.ne.s32.totalorder %s169, %s170
      %p181 = scmp.eq.s32.totalorder %s17, 0
      %p182 = por %p180, %p181
      %p183 = scmp.ne.s32.totalorder %s169, %s170
      %p184 = scmp.eq.s32.totalorder %s18, 5
      %p185 = por %p183, %p184
      %p187 = scmp.ne.s32.totalorder %s170, %s186
      %p188 = scmp.eq.s32.totalorder %s18, 0
      %p189 = por %p187, %p188
      %p190 = scmp.le.s32.totalorder 1, %s12
      %p191 = scmp.lt.s32.totalorder %s12, 7
      %p192 = pnand %p190, %p191
      %p193 = pneg %p192
      // Predicated region
      $region9: #{tpu_custom_call.1} parent=5 // pred_check
        _
      $region10: #{tpu_custom_call.1} parent=5 // pred_check_branch
        %195 = sbr.rel (%p192) target = $region12
      $region11: #{tpu_custom_call.1} parent=5 // pred_region
        %s196 = ssub.s32 %s12, 1
        // Predicated region
        $region13: #{tpu_custom_call.1} parent=11 // pred_check
          %p197 = pneg %p110
        $region14: #{tpu_custom_call.1} parent=11 // pred_check_branch
          %199 = sbr.rel (%p197) target = $region16
        $region15: #{tpu_custom_call.1} parent=11 // pred_region
          _
        $region16: #{tpu_custom_call.1} parent=11 // pred_fallthru
          _
        // Predicated region
        $region17: #{tpu_custom_call.1} parent=11 // pred_check
          %p200 = pneg %p131
        $region18: #{tpu_custom_call.1} parent=11 // pred_check_branch
          %202 = sbr.rel (%p200) target = $region20
        $region19: #{tpu_custom_call.1} parent=11 // pred_region
          _
        $region20: #{tpu_custom_call.1} parent=11 // pred_fallthru
          _
        // Predicated region
        $region21: #{tpu_custom_call.1} parent=11 // pred_check
          %p203 = pneg %p152
        $region22: #{tpu_custom_call.1} parent=11 // pred_check_branch
          %205 = sbr.rel (%p203) target = $region24
        $region23: #{tpu_custom_call.1} parent=11 // pred_region
          %207 = vsyncadd [#allocation4], 0
          %s209 = sshll.u32 %s4, 4
          %s210 = int_to_ptr.vmem [resolvable:$true] %s209
          %212 = dma.vmem_to_smem %s210, 64, [#allocation3], [#allocation4]
        $region24: #{tpu_custom_call.1} parent=11 // pred_fallthru
          _
      $region12: #{tpu_custom_call.1} parent=5 // pred_fallthru
        _
      %p213 = scmp.lt.s32.totalorder %s12, 6
      // Predicated region
      $region25: #{tpu_custom_call.1} parent=5 // pred_check
        %p214 = pneg %p213
      $region26: #{tpu_custom_call.1} parent=5 // pred_check_branch
        %216 = sbr.rel (%p214) target = $region28
      $region27: #{tpu_custom_call.1} parent=5 // pred_region
        // Predicated region
        $region29: #{tpu_custom_call.1} parent=27 // pred_check
          %p217 = pneg %p55
        $region30: #{tpu_custom_call.1} parent=27 // pred_check_branch
          %219 = sbr.rel (%p217) target = $region32
        $region31: #{tpu_custom_call.1} parent=27 // pred_region
          %p220 = scmp.lt.s32.totalorder %s21, 2
          %s221 = scalar_select %p220, %s21, 2
          %p222 = scmp.lt.s32.totalorder %s19, 1
          %s223 = scalar_select %p222, %s19, 1
          %p224 = scmp.lt.s32.totalorder %s20, 0
          %s225 = scalar_select %p224, %s20, 0
          %s226 = smul.addr %s223, 2
          %s227 = sadd.s32 %s225, %s226
          %s228 = smul.addr %s221, 4
          %s229 = sadd.s32 %s227, %s228
          %s230 = smul.addr %s229, 8
          %s231 = scalar_lea.vmem %s0, %s230
        $region32: #{tpu_custom_call.1} parent=27 // pred_fallthru
          _
        // Predicated region
        $region33: #{tpu_custom_call.1} parent=27 // pred_check
          %p232 = pneg %p83
        $region34: #{tpu_custom_call.1} parent=27 // pred_check_branch
          %234 = sbr.rel (%p232) target = $region36
        $region35: #{tpu_custom_call.1} parent=27 // pred_region
          %p235 = scmp.lt.s32.totalorder %s19, 1
          %s236 = scalar_select %p235, %s19, 1
          %p237 = scmp.lt.s32.totalorder %s20, 0
          %s238 = scalar_select %p237, %s20, 0
          %s239 = smul.addr %s236, 2
          %s240 = sadd.s32 %s238, %s239
          %s241 = smul.addr %s240, 8
          %s242 = scalar_lea.vmem %s1, %s241
        $region36: #{tpu_custom_call.1} parent=27 // pred_fallthru
          _
      $region28: #{tpu_custom_call.1} parent=5 // pred_fallthru
        _
      %p243 = scmp.le.s32.totalorder 1, %s12
      %p244 = scmp.lt.s32.totalorder %s12, 7
      %p245 = pnand %p243, %p244
      %p246 = pneg %p245
      // Predicated region
      $region37: #{tpu_custom_call.1} parent=5 // pred_check
        _
      $region38: #{tpu_custom_call.1} parent=5 // pred_check_branch
        %248 = sbr.rel (%p245) target = $region40
      $region39: #{tpu_custom_call.1} parent=5 // pred_region
        %s249 = ssub.s32 %s12, 1
        // Predicated region
        $region41: #{tpu_custom_call.1} parent=39 // pred_check
          %p250 = pneg %p152
        $region42: #{tpu_custom_call.1} parent=39 // pred_check_branch
          %252 = sbr.rel (%p250) target = $region44
        $region43: #{tpu_custom_call.1} parent=39 // pred_region
          %254 = dma.done [#allocation4], 64
        $region44: #{tpu_custom_call.1} parent=39 // pred_fallthru
          _
        %255 = sfence
        %p256 = scmp.lt.s32.totalorder %s24, 2
        %s257 = scalar_select %p256, %s24, 2
        %p258 = scmp.lt.s32.totalorder %s22, 1
        %s259 = scalar_select %p258, %s22, 1
        %p260 = scmp.lt.s32.totalorder %s23, 0
        %s261 = scalar_select %p260, %s23, 0
        %s262 = smul.addr %s259, 2
        %s263 = sadd.s32 %s261, %s262
        %s264 = smul.addr %s257, 4
        %s265 = sadd.s32 %s263, %s264
        %s266 = smul.addr %s265, 8
        %s267 = scalar_lea.vmem %s0, %s266
        %p268 = pneg %p61
        %p269 = pneg %p58
        %p270 = scmp.lt.s32.totalorder %s22, 1
        %s271 = scalar_select %p270, %s22, 1
        %p272 = scmp.lt.s32.totalorder %s23, 0
        %s273 = scalar_select %p272, %s23, 0
        %s274 = smul.addr %s271, 2
        %s275 = sadd.s32 %s273, %s274
        %s276 = smul.addr %s275, 8
        %s277 = scalar_lea.vmem %s1, %s276
        %p278 = pneg %p89
        %p279 = pneg %p86
        %p280 = pneg %p110
        %p281 = pneg %p107
        %p282 = pneg %p131
        %p283 = pneg %p128
        %p284 = pneg %p152
        %p285 = pneg %p149
        %p286 = pneg %p182
        %p287 = pneg %p179
        %p288 = scmp.lt.s32.totalorder %s24, 2
        %s289 = scalar_select %p288, %s24, 2
        %p290 = scmp.lt.s32.totalorder %s22, 1
        %s291 = scalar_select %p290, %s22, 1
        %p292 = scmp.lt.s32.totalorder %s23, 0
        %s293 = scalar_select %p292, %s23, 0
        %s294 = smul.addr %s291, 2
        %s295 = sadd.s32 %s293, %s294
        %s296 = smul.addr %s289, 4
        %s297 = sadd.s32 %s295, %s296
        %s298 = smul.addr %s297, 8
        %s299 = scalar_lea.vmem %s5, %s298
        %p300 = scmp.lt.s32.totalorder %s24, 2
        %s301 = scalar_select %p300, %s24, 2
        %p302 = scmp.lt.s32.totalorder %s22, 1
        %s303 = scalar_select %p302, %s22, 1
        %p304 = scmp.lt.s32.totalorder %s23, 0
        %s305 = scalar_select %p304, %s23, 0
        %s306 = smul.addr %s303, 2
        %s307 = sadd.s32 %s305, %s306
        %s308 = smul.addr %s301, 4
        %s309 = sadd.s32 %s307, %s308
        %s310 = smul.addr %s309, 8
        %s311 = scalar_lea.vmem %s0, %s310
        %p312 = scmp.lt.s32.totalorder %s22, 1
        %s313 = scalar_select %p312, %s22, 1
        %p314 = scmp.lt.s32.totalorder %s23, 0
        %s315 = scalar_select %p314, %s23, 0
        %s316 = smul.addr %s313, 2
        %s317 = sadd.s32 %s315, %s316
        %s318 = smul.addr %s317, 8
        %s319 = scalar_lea.vmem %s1, %s318
        %p320 = scmp.lt.s32.totalorder %s24, 2
        %s321 = scalar_select %p320, %s24, 2
        %p322 = scmp.lt.s32.totalorder %s22, 1
        %s323 = scalar_select %p322, %s22, 1
        %p324 = scmp.lt.s32.totalorder %s23, 0
        %s325 = scalar_select %p324, %s23, 0
        %s326 = smul.addr %s323, 2
        %s327 = sadd.s32 %s325, %s326
        %s328 = smul.addr %s321, 4
        %s329 = sadd.s32 %s327, %s328
        %s330 = smul.addr %s329, 8
        %s331 = scalar_lea.vmem %s5, %s330
        %p332 = scmp.eq.s32.totalorder %s24, 0
        // Predicated region
        $region45: #{tpu_custom_call.1} parent=39 // pred_check
          %p333 = pneg %p332
        $region46: #{tpu_custom_call.1} parent=39 // pred_check_branch
          %335 = sbr.rel (%p333) target = $region48
        $region47: #{tpu_custom_call.1} parent=39 // pred_region
          %v336 = vld [vmem:[%s319] sm:$0xff]
          %v337 = vld [vmem:[%s319 + $0x8] sm:$0xf]
          %338 = vst [vmem:[#allocation2] sm:$0xff] %v336
          %339 = vst [vmem:[#allocation2 + $0x8] sm:$0xf] %v337
        $region48: #{tpu_custom_call.1} parent=39 // pred_fallthru
          _
        %v340 = vld [vmem:[%s311] sm:$0xff]
        %v341 = vld [vmem:[%s311 + $0x8] sm:$0xf]
        %v342 = vld [vmem:[#allocation2] sm:$0xff]
        %v343 = vld [vmem:[#allocation2 + $0x8] sm:$0xf]
        %s344 = smul.u32 %s24, 2
        %s345 = scalar_lea.vmem %s2, %s344
        %v346 = vld [vmem:[%s345] sm:$0x3]
        %s347 = scalar_lea.vmem %s3, %s344
        %v348 = vld [vmem:[%s347] sm:$0x3]
        %vm349 = vcmask 97280
        %v351 = vsel %vm349, %v348, 0
        %vm353 = vcmask 1043456
        %v355 = vsel %vm353, %v343, 0
        %357 = vmatpush.msra.mxu0 0.0
        %358 = vmatpush.msra.mxu0 0.0
        %359 = vmatpush.msra.mxu0 0.0
        %360 = vmatpush.msra.mxu0 0.0
        %361 = vmatpush.msra.mxu0 0.0
        %362 = vmatpush.msra.mxu0 0.0
        %363 = vmatpush.msra.mxu0 0.0
        %364 = vmatpush.msra.mxu0 0.0
        %365 = vmatpush.msra.mxu0 0.0
        %366 = vmatpush.msra.mxu0 0.0
        %367 = vmatpush.msra.mxu0 0.0
        %368 = vmatpush.msra.mxu0 0.0
        %369 = vmatpush.msra.mxu0 0.0
        %370 = vmatpush.msra.mxu0 0.0
        %371 = vmatpush.msra.mxu0 %v355
        %372 = vmatpush.msra.mxu0 %v342
        %373 = vmatmul.f32.gmra.mxu0 %v351
        %v374 = vpop.f32.mrf.mxu0
        %v375 = vadd.f32 0.0, %v374
        %376 = vdwg.mxu0
        %v378 = vsel %vm349, %v346, 0
        %v381 = vsel %vm353, %v341, 0
        %383 = vmatpush.msra.mxu0 0.0
        %384 = vmatpush.msra.mxu0 0.0
        %385 = vmatpush.msra.mxu0 0.0
        %386 = vmatpush.msra.mxu0 0.0
        %387 = vmatpush.msra.mxu0 0.0
        %388 = vmatpush.msra.mxu0 0.0
        %389 = vmatpush.msra.mxu0 0.0
        %390 = vmatpush.msra.mxu0 0.0
        %391 = vmatpush.msra.mxu0 0.0
        %392 = vmatpush.msra.mxu0 0.0
        %393 = vmatpush.msra.mxu0 0.0
        %394 = vmatpush.msra.mxu0 0.0
        %395 = vmatpush.msra.mxu0 0.0
        %396 = vmatpush.msra.mxu0 0.0
        %397 = vmatpush.msra.mxu0 %v381
        %398 = vmatpush.msra.mxu0 %v340
        %399 = vmatmul.f32.gmra.mxu0 %v378
        %v400 = vpop.f32.mrf.mxu0
        %v401 = vadd.f32 %v375, %v400
        %402 = vdwg.mxu0
        %s403 = smul.u32 %s24, 128
        %s404 = sld [smem:[#allocation3 + %s403]]
        %v405 = vstv %s404
        %v406 = vadd.f32 %v401, %v405
        %v407 = vxor.u32 %v406, 2147483648
        %v408 = vmul.f32 %v407, 1.442695
        %v409 = vpow.pop %v408
        %v410 = vadd.f32 %v409, 1.0
        %v411 = vrcp.pop %v410
        %v412 = vmul.f32 %v410, %v411
        %v413 = vsub.f32 1.0, %v412
        %v414 = vmul.f32 %v411, %v413
        %v415 = vadd.f32 %v411, %v414
        %vm416 = vweird.f32 %v410
        %vm417 = vweird.f32 %v411
        %vm418 = vmor %vm416, %vm417
        %v419 = vsel %vm418, %v411, %v415
        %v420 = vand.u32 2147483647, %v410
        %vm421 = vcmp.eq.f32.partialorder %v420, 8.507059e+37
        %v422 = vand.u32 %v410, 2147483648
        %v423 = vor.u32 1.1754944e-38, %v422
        %v424 = vsel %vm421, %v423, %v419
        %v425 = vmul.f32 1.0, %v424
        %s426 = sadd.s32 %s403, 1
        %s427 = sld [smem:[#allocation3 + %s426]]
        %v428 = vstv %s427
        %v429 = vadd.f32 %v401, %v428
        %v430 = vxor.u32 %v429, 2147483648
        %v431 = vmul.f32 %v430, 1.442695
        %v432 = vpow.pop %v431
        %v433 = vadd.f32 %v432, 1.0
        %v434 = vrcp.pop %v433
        %v435 = vmul.f32 %v433, %v434
        %v436 = vsub.f32 1.0, %v435
        %v437 = vmul.f32 %v434, %v436
        %v438 = vadd.f32 %v434, %v437
        %vm439 = vweird.f32 %v433
        %vm440 = vweird.f32 %v434
        %vm441 = vmor %vm439, %vm440
        %v442 = vsel %vm441, %v434, %v438
        %v443 = vand.u32 2147483647, %v433
        %vm444 = vcmp.eq.f32.partialorder %v443, 8.507059e+37
        %v445 = vand.u32 %v433, 2147483648
        %v446 = vor.u32 1.1754944e-38, %v445
        %v447 = vsel %vm444, %v446, %v442
        %v448 = vmul.f32 1.0, %v447
        %v449 = vperm.slane %v425, 0
        %v450 = vmul.f32 %v340, %v449
        %v451 = vmul.f32 %v341, %v449
        %v452 = vperm.slane %v448, 1
        %v453 = vmul.f32 %v342, %v452
        %v454 = vmul.f32 %v343, %v452
        %v455 = vadd.f32 %v450, %v453
        %v456 = vadd.f32 %v451, %v454
        %457 = vst [vmem:[%s331] sm:$0xff] %v455
        %458 = vst [vmem:[%s331 + $0x8] sm:$0xf] %v456
        %459 = vst [vmem:[#allocation2] sm:$0xff] %v455
        %460 = vst [vmem:[#allocation2 + $0x8] sm:$0xf] %v456
        %p461 = scmp.lt.s32.totalorder %s24, 2
        %s462 = scalar_select %p461, %s24, 2
        %p463 = scmp.lt.s32.totalorder %s22, 1
        %s464 = scalar_select %p463, %s22, 1
        %p465 = scmp.lt.s32.totalorder %s23, 0
        %s466 = scalar_select %p465, %s23, 0
        %s467 = smul.addr %s464, 2
        %s468 = sadd.s32 %s466, %s467
        %s469 = smul.addr %s462, 4
        %s470 = sadd.s32 %s468, %s469
        %s471 = smul.addr %s470, 8
        %s472 = scalar_lea.vmem %s5, %s471
        // Predicated region
        $region49: #{tpu_custom_call.1} parent=39 // pred_check
          %p473 = pneg %p179
        $region50: #{tpu_custom_call.1} parent=39 // pred_check_branch
          %475 = sbr.rel (%p473) target = $region52
        $region51: #{tpu_custom_call.1} parent=39 // pred_region
          _
        $region52: #{tpu_custom_call.1} parent=39 // pred_fallthru
          _
      $region40: #{tpu_custom_call.1} parent=5 // pred_fallthru
        _
      %p476 = scmp.le.s32.totalorder 2, %s12
      // Predicated region
      $region53: #{tpu_custom_call.1} parent=5 // pred_check
        %p477 = pneg %p476
      $region54: #{tpu_custom_call.1} parent=5 // pred_check_branch
        %479 = sbr.rel (%p477) target = $region56
      $region55: #{tpu_custom_call.1} parent=5 // pred_region
        %s480 = ssub.s32 %s12, 2
        // Predicated region
        $region57: #{tpu_custom_call.1} parent=55 // pred_check
          %p481 = pneg %p185
        $region58: #{tpu_custom_call.1} parent=55 // pred_check_branch
          %483 = sbr.rel (%p481) target = $region60
        $region59: #{tpu_custom_call.1} parent=55 // pred_region
          %p484 = scmp.lt.s32.totalorder %s27, 2
          %s485 = scalar_select %p484, %s27, 2
          %p486 = scmp.lt.s32.totalorder %s25, 1
          %s487 = scalar_select %p486, %s25, 1
          %p488 = scmp.lt.s32.totalorder %s26, 0
          %s489 = scalar_select %p488, %s26, 0
          %s490 = smul.addr %s487, 2
          %s491 = sadd.s32 %s489, %s490
          %s492 = smul.addr %s485, 4
          %s493 = sadd.s32 %s491, %s492
          %s494 = smul.addr %s493, 8
          %s495 = scalar_lea.vmem %s5, %s494
        $region60: #{tpu_custom_call.1} parent=55 // pred_fallthru
          _
      $region56: #{tpu_custom_call.1} parent=5 // pred_fallthru
        _
    $region6: #{tpu_custom_call.1} parent=1 // loop_footer
      %s16 = sadd.s32 1, %s12
    $region7: #{tpu_custom_call.1} parent=1 // loop_footer_branch
      %11 = sbr.rel target = $region3
    $region8: #{tpu_custom_call.1} parent=1 // loop_exit
      _
    %496 = vsyncpa [#allocation4], 1
    %s497 = scalar_lea.sflag [#allocation4], 1
    %498 = vsyncpa %s497, 1

</llo_original>
